<compile_context>
chip_gen: v5e
topology: v5e:2x2
jax: 0.10.0
libtpu: 0.0.40
codegen_flags: <defaults>
</compile_context>

<pallas_src>
import jax
import jax.numpy as jnp
from jax.experimental import pallas as pl
from jax.experimental.pallas import tpu as pltpu


def _pool_classify_kernel(x_ref, p_ref, w_ref, b_ref, o_ref):
    # x_ref: (bn*HW, C)   native dtype (bf16/f32), channels on lanes
    # p_ref: (bn, bn*HW)  native dtype, block-diagonal ones
    # w_ref: (C, Kp)      f32, pre-transposed and pre-scaled by 1/HW
    # b_ref: (1, Kp)      f32
    # o_ref: (bn, Kp)
    pooled = jnp.dot(p_ref[...], x_ref[...],
                     preferred_element_type=jnp.float32)        # (bn, C) f32 sums (MXU)
    logits = jnp.dot(pooled, w_ref[...],
                     preferred_element_type=jnp.float32) + b_ref[...]
    o_ref[...] = logits.astype(o_ref.dtype)


def _choose_block_n(n, hw, c, itemsize, budget_bytes=8 << 20):
    """Pick a batch tile so 2x (double buffer) x tile stays well under the
    v7x scoped-VMEM budget while keeping blocks (8,128)-legal."""
    per_sample = max(1, hw * c * itemsize)
    cap = max(1, budget_bytes // per_sample)
    bn = min(n, cap, 32)
    if bn == n:
        return bn                 # block == full batch dim: always a legal shape
    if bn >= 8:
        return (bn // 8) * 8      # multiple of 8 keeps block rows sublane-aligned
    return min(8, n)              # minimum aligned tile (may exceed budget slightly)


def model_part_forward(x, weight, bias, *, block_n=None):
    """Forward of Model_Part: global average pool + linear classifier.

    x: (N, C, H, W), weight: (K, C), bias: (K,)  ->  (N, K)
    """
    N, C, H, W = x.shape
    K = weight.shape[0]
    HW = H * W
    itemsize = jnp.dtype(x.dtype).itemsize

    if block_n is None:
        block_n = _choose_block_n(N, HW, C, itemsize)
    grid_n = pl.cdiv(N, block_n)
    n_pad = grid_n * block_n

    # Channels-last, lane-dense layout: (N*HW, C) with C on the 128-lane axis.
    x2d = jnp.transpose(x, (0, 2, 3, 1)).reshape(N * HW, C)
    if n_pad != N:
        x2d = jnp.pad(x2d, ((0, (n_pad - N) * HW), (0, 0)))

    # Block-diagonal pooling matrix of ones: pooled_sum = P @ x_tile (MXU).
    pool_mat = jnp.repeat(jnp.eye(block_n, dtype=x.dtype), HW, axis=1)

    # Classifier params: pre-transpose to (C, K), fold the 1/HW mean scaling
    # into the weights, zero-pad K up to a multiple of 128 lanes.
    k_pad = max(128, ((K + 127) // 128) * 128)
    w_t = weight.T.astype(jnp.float32) / jnp.float32(HW)            # (C, K)
    w_t = jnp.pad(w_t, ((0, 0), (0, k_pad - K)))                    # (C, Kp)
    b_pad = jnp.pad(bias.astype(jnp.float32), (0, k_pad - K)).reshape(1, k_pad)

    x_block_bytes = block_n * HW * C * itemsize
    vmem_limit = int(min(64 << 20, max(32 << 20, 2 * x_block_bytes + (8 << 20))))

    cost = pl.CostEstimate(
        flops=2 * N * HW * C + 2 * N * C * k_pad,
        transcendentals=0,
        bytes_accessed=(N * HW * C * itemsize + C * k_pad * 4
                        + k_pad * 4 + N * k_pad * itemsize),
    )

    out_padded = pl.pallas_call(
        _pool_classify_kernel,
        out_shape=jax.ShapeDtypeStruct((n_pad, k_pad), x.dtype),
        grid=(grid_n,),
        in_specs=[
            pl.BlockSpec((block_n * HW, C), lambda i: (i, 0)),          # x stream
            pl.BlockSpec((block_n, block_n * HW), lambda i: (0, 0)),    # pooling P
            pl.BlockSpec((C, k_pad), lambda i: (0, 0)),                 # W^T / HW
            pl.BlockSpec((1, k_pad), lambda i: (0, 0)),                 # bias
        ],
        out_specs=pl.BlockSpec((block_n, k_pad), lambda i: (i, 0)),
        compiler_params=pltpu.CompilerParams(
            dimension_semantics=("parallel",),
            vmem_limit_bytes=vmem_limit,
        ),
        cost_estimate=cost,
    )(x2d, pool_mat, w_t, b_pad)

    return out_padded[:N, :K]


if __name__ == "__main__":
    # Small shapes consistent with the module: batch=2, channels=4, spatial=16,
    # num_classes=8.
    N, C, H, W, K = 2, 4, 16, 16, 8

    key = jax.random.PRNGKey(0)
    kx, kw, kb = jax.random.split(key, 3)

    x = jax.random.normal(kx, (N, C, H, W), dtype=jnp.float32)
    # Deterministic synthetic classifier parameters (nn.Linear(C, K) shapes).
    weight = jax.random.normal(kw, (K, C), dtype=jnp.float32) * 0.1
    bias = jax.random.normal(kb, (K,), dtype=jnp.float32) * 0.1

    out = model_part_forward(x, weight, bias)
    out = jax.block_until_ready(out)

    # Pure-JAX reference check.
    ref = jnp.mean(x, axis=(2, 3)) @ weight.T + bias
    assert out.shape == (N, K)
    assert jnp.allclose(out, ref, atol=1e-5, rtol=1e-5)

    print("KERNEL_OK")
</pallas_src>

<mosaic_0001>
module attributes {stable_mosaic.version = 11 : i64} {
  func.func @_pool_classify_kernel(%arg0: i32, %arg1: memref<512x4xf32, #tpu.memory_space<vmem>>, %arg2: memref<2x512xf32, #tpu.memory_space<vmem>>, %arg3: memref<4x128xf32, #tpu.memory_space<vmem>>, %arg4: memref<1x128xf32, #tpu.memory_space<vmem>>, %arg5: memref<2x128xf32, #tpu.memory_space<vmem>>) attributes {dimension_semantics = [#tpu.dimension_semantics<parallel>], iteration_bounds = array<i64: 1>, scalar_prefetch = 0 : i64, scratch_operands = 0 : i64, tpu.core_type = #tpu.core_type<tc>, window_params = [{transform_indices = @transform_0, window_bounds = array<i64: 512, 4>}, {pipeline_mode = #tpu.pipeline_mode<synchronous>, transform_indices = @transform_1, window_bounds = array<i64: 2, 512>}, {pipeline_mode = #tpu.pipeline_mode<synchronous>, transform_indices = @transform_2, window_bounds = array<i64: 4, 128>}, {pipeline_mode = #tpu.pipeline_mode<synchronous>, transform_indices = @transform_3, window_bounds = array<i64: 1, 128>}, {transform_indices = @transform_4, window_bounds = array<i64: 2, 128>}]} {
    %c0 = arith.constant 0 : index
    %c0_0 = arith.constant 0 : index
    %0 = vector.load %arg2[%c0, %c0_0] : memref<2x512xf32, #tpu.memory_space<vmem>>, vector<2x512xf32>
    %c0_1 = arith.constant 0 : index
    %c0_2 = arith.constant 0 : index
    %1 = vector.load %arg1[%c0_1, %c0_2] : memref<512x4xf32, #tpu.memory_space<vmem>>, vector<512x4xf32>
    %cst = arith.constant dense<0.000000e+00> : vector<2x4xf32>
    %2 = tpu.matmul %0, %1, %cst {dimension_numbers = #tpu.dot_dimension_numbers<[1], [0], [0], [1], [0, 0, 1, 1], [], []>} : vector<2x512xf32>, vector<512x4xf32>, vector<2x4xf32> -> vector<2x4xf32>
    %c0_3 = arith.constant 0 : index
    %c0_4 = arith.constant 0 : index
    %3 = vector.load %arg3[%c0_3, %c0_4] : memref<4x128xf32, #tpu.memory_space<vmem>>, vector<4x128xf32>
    %cst_5 = arith.constant dense<0.000000e+00> : vector<2x128xf32>
    %4 = tpu.matmul %2, %3, %cst_5 {dimension_numbers = #tpu.dot_dimension_numbers<[1], [0], [0], [1], [0, 0, 1, 1], [], []>} : vector<2x4xf32>, vector<4x128xf32>, vector<2x128xf32> -> vector<2x128xf32>
    %c0_6 = arith.constant 0 : index
    %c0_7 = arith.constant 0 : index
    %5 = vector.load %arg4[%c0_6, %c0_7] : memref<1x128xf32, #tpu.memory_space<vmem>>, vector<1x128xf32>
    %6 = vector.broadcast %5 : vector<1x128xf32> to vector<2x128xf32>
    %7 = arith.addf %4, %6 : vector<2x128xf32>
    %c0_8 = arith.constant 0 : index
    %c0_9 = arith.constant 0 : index
    %8 = vector.load %arg5[%c0_8, %c0_9] : memref<2x128xf32, #tpu.memory_space<vmem>>, vector<2x128xf32>
    tpu.vector_store %arg5[%c0_8, %c0_9], %7 {strides = array<i32>} : memref<2x128xf32, #tpu.memory_space<vmem>>, vector<2x128xf32>,
    return
  }
  func.func @transform_0(%arg0: i32) -> (i32, i32) {
    %c0_i32 = arith.constant 0 : i32
    %c0_i32_0 = arith.constant 0 : i32
    return %arg0, %c0_i32 : i32, i32
  }
  func.func @transform_1(%arg0: i32) -> (i32, i32) {
    %c0_i32 = arith.constant 0 : i32
    %c0_i32_0 = arith.constant 0 : i32
    %c0_i32_1 = arith.constant 0 : i32
    return %c0_i32, %c0_i32_0 : i32, i32
  }
  func.func @transform_2(%arg0: i32) -> (i32, i32) {
    %c0_i32 = arith.constant 0 : i32
    %c0_i32_0 = arith.constant 0 : i32
    %c0_i32_1 = arith.constant 0 : i32
    return %c0_i32, %c0_i32_0 : i32, i32
  }
  func.func @transform_3(%arg0: i32) -> (i32, i32) {
    %c0_i32 = arith.constant 0 : i32
    %c0_i32_0 = arith.constant 0 : i32
    %c0_i32_1 = arith.constant 0 : i32
    return %c0_i32, %c0_i32_0 : i32, i32
  }
  func.func @transform_4(%arg0: i32) -> (i32, i32) {
    %c0_i32 = arith.constant 0 : i32
    %c0_i32_0 = arith.constant 0 : i32
    return %arg0, %c0_i32 : i32, i32
  }
}

</mosaic_0001>

<llo_original>
// kernel: tpu_custom_call.1
$region0: #{tpu_custom_call.1}
  #allocation0 [shape = 'u32[]', space=smem, size = 0x4, offset = 0x4, fixed_abs, tag = 'smem constant byte address 0x4 - core index']
  #allocation1 [shape = 'u32[72,128]{1,0:T(1,128)}', space=vmem, size = 0x9000, scoped, tag = 'internal scratch']
  %s0 = inlined_call_operand.vmem [shape: f32[512,4], index: 0, kind: input, shape index: {}]
  %s1 = inlined_call_operand.vmem [shape: f32[2,512], index: 1, kind: input, shape index: {}]
  %s2 = inlined_call_operand.vmem [shape: f32[4,128], index: 2, kind: input, shape index: {}]
  %s3 = inlined_call_operand.vmem [shape: f32[1,128], index: 3, kind: input, shape index: {}]
  %s4 = inlined_call_operand.hbm [shape: f32[2,128], index: 4, kind: output, shape index: {}]
  %s5 = sld [smem:[#allocation0]]
  $region26: #{tpu_custom_call.1} parent=0
    _
  %s7 = ssub.s32 1, %s5
  %s8 = scalar_select 0, %s7, %s5
  $region1: #{tpu_custom_call.1} parent=0
    #allocation2 [shape = 'u8[1024]{0}', space=vmem, size = 0x400, scoped, tag = 'output window, operand 0, single buffered']
    #allocation3 [shape = 's32[1]{0}', space=sflag, size = 0x4, scoped, tag = 'scoped memory for tpu_custom_call.1']
    %9 = vsyncpa [#allocation3], 0
    // Predicated region
    $region2: #{tpu_custom_call.1} parent=1 // pred_check
      _
    $region3: #{tpu_custom_call.1} parent=1 // pred_check_branch
      %11 = sbr.rel (0) target = $region5
    $region4: #{tpu_custom_call.1} parent=1 // pred_region
      _
    $region5: #{tpu_custom_call.1} parent=1 // pred_fallthru
      _
    // Predicated region
    $region6: #{tpu_custom_call.1} parent=1 // pred_check
      _
    $region7: #{tpu_custom_call.1} parent=1 // pred_check_branch
      %13 = sbr.rel (0) target = $region9
    $region8: #{tpu_custom_call.1} parent=1 // pred_region
      _
    $region9: #{tpu_custom_call.1} parent=1 // pred_fallthru
      _
    // Predicated region
    $region10: #{tpu_custom_call.1} parent=1 // pred_check
      _
    $region11: #{tpu_custom_call.1} parent=1 // pred_check_branch
      %15 = sbr.rel (0) target = $region13
    $region12: #{tpu_custom_call.1} parent=1 // pred_region
      _
    $region13: #{tpu_custom_call.1} parent=1 // pred_fallthru
      _
    // Predicated region
    $region14: #{tpu_custom_call.1} parent=1 // pred_check
      _
    $region15: #{tpu_custom_call.1} parent=1 // pred_check_branch
      %17 = sbr.rel (0) target = $region17
    $region16: #{tpu_custom_call.1} parent=1 // pred_region
      _
    $region17: #{tpu_custom_call.1} parent=1 // pred_fallthru
      _
    %v18 = vld [vmem:[%s1] sm:$0xff]
    %v19 = vld [vmem:[%s0] sm:$0xff]
    %v20 = vld [vmem:[%s0 + $0x8] sm:$0xff]
    %v21 = vld [vmem:[%s0 + $0x10] sm:$0xff]
    %v22 = vld [vmem:[%s0 + $0x18] sm:$0xff]
    %v23 = vld [vmem:[%s0 + $0x20] sm:$0xff]
    %v24 = vld [vmem:[%s0 + $0x28] sm:$0xff]
    %v25 = vld [vmem:[%s0 + $0x30] sm:$0xff]
    %v26 = vld [vmem:[%s0 + $0x38] sm:$0xff]
    %v27 = vld [vmem:[%s0 + $0x40] sm:$0xff]
    %v28 = vld [vmem:[%s0 + $0x48] sm:$0xff]
    %v29 = vld [vmem:[%s0 + $0x50] sm:$0xff]
    %v30 = vld [vmem:[%s0 + $0x58] sm:$0xff]
    %v31 = vld [vmem:[%s0 + $0x60] sm:$0xff]
    %v32 = vld [vmem:[%s0 + $0x68] sm:$0xff]
    %v33 = vld [vmem:[%s0 + $0x70] sm:$0xff]
    %v34 = vld [vmem:[%s0 + $0x78] sm:$0xff]
    %v35 = vld [vmem:[%s0 + $0x80] sm:$0xff]
    %v36 = vld [vmem:[%s0 + $0x88] sm:$0xff]
    %v37 = vld [vmem:[%s0 + $0x90] sm:$0xff]
    %v38 = vld [vmem:[%s0 + $0x98] sm:$0xff]
    %v39 = vld [vmem:[%s0 + $0xa0] sm:$0xff]
    %v40 = vld [vmem:[%s0 + $0xa8] sm:$0xff]
    %v41 = vld [vmem:[%s0 + $0xb0] sm:$0xff]
    %v42 = vld [vmem:[%s0 + $0xb8] sm:$0xff]
    %v43 = vld [vmem:[%s0 + $0xc0] sm:$0xff]
    %v44 = vld [vmem:[%s0 + $0xc8] sm:$0xff]
    %v45 = vld [vmem:[%s0 + $0xd0] sm:$0xff]
    %v46 = vld [vmem:[%s0 + $0xd8] sm:$0xff]
    %v47 = vld [vmem:[%s0 + $0xe0] sm:$0xff]
    %v48 = vld [vmem:[%s0 + $0xe8] sm:$0xff]
    %v49 = vld [vmem:[%s0 + $0xf0] sm:$0xff]
    %v50 = vld [vmem:[%s0 + $0xf8] sm:$0xff]
    %v51 = vld [vmem:[%s0 + $0x100] sm:$0xff]
    %v52 = vld [vmem:[%s0 + $0x108] sm:$0xff]
    %v53 = vld [vmem:[%s0 + $0x110] sm:$0xff]
    %v54 = vld [vmem:[%s0 + $0x118] sm:$0xff]
    %v55 = vld [vmem:[%s0 + $0x120] sm:$0xff]
    %v56 = vld [vmem:[%s0 + $0x128] sm:$0xff]
    %v57 = vld [vmem:[%s0 + $0x130] sm:$0xff]
    %v58 = vld [vmem:[%s0 + $0x138] sm:$0xff]
    %v59 = vld [vmem:[%s0 + $0x140] sm:$0xff]
    %v60 = vld [vmem:[%s0 + $0x148] sm:$0xff]
    %v61 = vld [vmem:[%s0 + $0x150] sm:$0xff]
    %v62 = vld [vmem:[%s0 + $0x158] sm:$0xff]
    %v63 = vld [vmem:[%s0 + $0x160] sm:$0xff]
    %v64 = vld [vmem:[%s0 + $0x168] sm:$0xff]
    %v65 = vld [vmem:[%s0 + $0x170] sm:$0xff]
    %v66 = vld [vmem:[%s0 + $0x178] sm:$0xff]
    %v67 = vld [vmem:[%s0 + $0x180] sm:$0xff]
    %v68 = vld [vmem:[%s0 + $0x188] sm:$0xff]
    %v69 = vld [vmem:[%s0 + $0x190] sm:$0xff]
    %v70 = vld [vmem:[%s0 + $0x198] sm:$0xff]
    %v71 = vld [vmem:[%s0 + $0x1a0] sm:$0xff]
    %v72 = vld [vmem:[%s0 + $0x1a8] sm:$0xff]
    %v73 = vld [vmem:[%s0 + $0x1b0] sm:$0xff]
    %v74 = vld [vmem:[%s0 + $0x1b8] sm:$0xff]
    %v75 = vld [vmem:[%s0 + $0x1c0] sm:$0xff]
    %v76 = vld [vmem:[%s0 + $0x1c8] sm:$0xff]
    %v77 = vld [vmem:[%s0 + $0x1d0] sm:$0xff]
    %v78 = vld [vmem:[%s0 + $0x1d8] sm:$0xff]
    %v79 = vld [vmem:[%s0 + $0x1e0] sm:$0xff]
    %v80 = vld [vmem:[%s0 + $0x1e8] sm:$0xff]
    %v81 = vld [vmem:[%s0 + $0x1f0] sm:$0xff]
    %v82 = vld [vmem:[%s0 + $0x1f8] sm:$0xff]
    %84 = vst [vmem:[#allocation1] ss:$4 sm:$0xff] %v18
    %v85 = vld.sshfl [vmem:[#allocation1] sm:$0xff pattern:$0x73625140]
    %v86 = vld.sshfl [vmem:[#allocation1 + $0x8] sm:$0xff pattern:$0x73625140]
    %v87 = vld.sshfl [vmem:[#allocation1 + $0x10] sm:$0xff pattern:$0x73625140]
    %v88 = vld.sshfl [vmem:[#allocation1 + $0x18] sm:$0xff pattern:$0x73625140]
    %93 = vmatpush.msra.mxu0 %v34
    %94 = vmatpush.msra.mxu0 %v33
    %95 = vmatpush.msra.mxu0 %v32
    %96 = vmatpush.msra.mxu0 %v31
    %97 = vmatpush.msra.mxu0 %v30
    %98 = vmatpush.msra.mxu0 %v29
    %99 = vmatpush.msra.mxu0 %v28
    %100 = vmatpush.msra.mxu0 %v27
    %101 = vmatpush.msra.mxu0 %v26
    %102 = vmatpush.msra.mxu0 %v25
    %103 = vmatpush.msra.mxu0 %v24
    %104 = vmatpush.msra.mxu0 %v23
    %105 = vmatpush.msra.mxu0 %v22
    %106 = vmatpush.msra.mxu0 %v21
    %107 = vmatpush.msra.mxu0 %v20
    %108 = vmatpush.msra.mxu0 %v19
    %109 = vmatmul.f32.gmra.mxu0 %v85
    %v110 = vpop.f32.mrf.mxu0
    %v111 = vadd.f32 0.0, %v110
    %112 = vdwg.mxu0
    %113 = vmatpush.msra.mxu0 %v50
    %114 = vmatpush.msra.mxu0 %v49
    %115 = vmatpush.msra.mxu0 %v48
    %116 = vmatpush.msra.mxu0 %v47
    %117 = vmatpush.msra.mxu0 %v46
    %118 = vmatpush.msra.mxu0 %v45
    %119 = vmatpush.msra.mxu0 %v44
    %120 = vmatpush.msra.mxu0 %v43
    %121 = vmatpush.msra.mxu0 %v42
    %122 = vmatpush.msra.mxu0 %v41
    %123 = vmatpush.msra.mxu0 %v40
    %124 = vmatpush.msra.mxu0 %v39
    %125 = vmatpush.msra.mxu0 %v38
    %126 = vmatpush.msra.mxu0 %v37
    %127 = vmatpush.msra.mxu0 %v36
    %128 = vmatpush.msra.mxu0 %v35
    %129 = vmatmul.f32.gmra.mxu0 %v86
    %v130 = vpop.f32.mrf.mxu0
    %v131 = vadd.f32 %v111, %v130
    %132 = vdwg.mxu0
    %133 = vmatpush.msra.mxu0 %v66
    %134 = vmatpush.msra.mxu0 %v65
    %135 = vmatpush.msra.mxu0 %v64
    %136 = vmatpush.msra.mxu0 %v63
    %137 = vmatpush.msra.mxu0 %v62
    %138 = vmatpush.msra.mxu0 %v61
    %139 = vmatpush.msra.mxu0 %v60
    %140 = vmatpush.msra.mxu0 %v59
    %141 = vmatpush.msra.mxu0 %v58
    %142 = vmatpush.msra.mxu0 %v57
    %143 = vmatpush.msra.mxu0 %v56
    %144 = vmatpush.msra.mxu0 %v55
    %145 = vmatpush.msra.mxu0 %v54
    %146 = vmatpush.msra.mxu0 %v53
    %147 = vmatpush.msra.mxu0 %v52
    %148 = vmatpush.msra.mxu0 %v51
    %149 = vmatmul.f32.gmra.mxu0 %v87
    %v150 = vpop.f32.mrf.mxu0
    %v151 = vadd.f32 %v131, %v150
    %152 = vdwg.mxu0
    %153 = vmatpush.msra.mxu0 %v82
    %154 = vmatpush.msra.mxu0 %v81
    %155 = vmatpush.msra.mxu0 %v80
    %156 = vmatpush.msra.mxu0 %v79
    %157 = vmatpush.msra.mxu0 %v78
    %158 = vmatpush.msra.mxu0 %v77
    %159 = vmatpush.msra.mxu0 %v76
    %160 = vmatpush.msra.mxu0 %v75
    %161 = vmatpush.msra.mxu0 %v74
    %162 = vmatpush.msra.mxu0 %v73
    %163 = vmatpush.msra.mxu0 %v72
    %164 = vmatpush.msra.mxu0 %v71
    %165 = vmatpush.msra.mxu0 %v70
    %166 = vmatpush.msra.mxu0 %v69
    %167 = vmatpush.msra.mxu0 %v68
    %168 = vmatpush.msra.mxu0 %v67
    %169 = vmatmul.f32.gmra.mxu0 %v88
    %v170 = vpop.f32.mrf.mxu0
    %v171 = vadd.f32 %v151, %v170
    %172 = vdwg.mxu0
    %v173 = vld [vmem:[%s2] sm:$0xf]
    %v174 = vld [vmem:[%s3] sm:$0x1]
    %v176 = vperm.slane %v174, 0
    %vm178 = vcmask 31744
    %v180 = vsel %vm178, %v171, 0
    %vm182 = vcmask 1043456
    %v184 = vsel %vm182, %v173, 0
    %186 = vmatpush.msra.mxu0 0.0
    %187 = vmatpush.msra.mxu0 0.0
    %188 = vmatpush.msra.mxu0 0.0
    %189 = vmatpush.msra.mxu0 0.0
    %190 = vmatpush.msra.mxu0 0.0
    %191 = vmatpush.msra.mxu0 0.0
    %192 = vmatpush.msra.mxu0 0.0
    %193 = vmatpush.msra.mxu0 0.0
    %194 = vmatpush.msra.mxu0 0.0
    %195 = vmatpush.msra.mxu0 0.0
    %196 = vmatpush.msra.mxu0 0.0
    %197 = vmatpush.msra.mxu0 0.0
    %198 = vmatpush.msra.mxu0 0.0
    %199 = vmatpush.msra.mxu0 0.0
    %200 = vmatpush.msra.mxu0 0.0
    %201 = vmatpush.msra.mxu0 %v184
    %202 = vmatmul.f32.gmra.mxu0 %v180
    %v203 = vpop.f32.mrf.mxu0
    %v204 = vadd.f32 %v176, %v203
    %205 = vdwg.mxu0
    %206 = vst [vmem:[#allocation2] sm:$0x3] %v204
    // Predicated region
    $region18: #{tpu_custom_call.1} parent=1 // pred_check
      _
    $region19: #{tpu_custom_call.1} parent=1 // pred_check_branch
      %208 = sbr.rel (0) target = $region21
    $region20: #{tpu_custom_call.1} parent=1 // pred_region
      %210 = vsyncadd [#allocation3], 0
      %s212 = sshll.u32 [#allocation2], 4
      %s213 = int_to_ptr.vmem [resolvable:$true] %s212
      %s214 = sshll.u32 %s4, 4
      %s215 = int_to_ptr.hbm [resolvable:$true] %s214
      %217 = dma.vmem_to_hbm [thread:$0]  %s213, 32, %s215, [#allocation3]
    $region21: #{tpu_custom_call.1} parent=1 // pred_fallthru
      _
    // Predicated region
    $region22: #{tpu_custom_call.1} parent=1 // pred_check
      _
    $region23: #{tpu_custom_call.1} parent=1 // pred_check_branch
      %219 = sbr.rel (0) target = $region25
    $region24: #{tpu_custom_call.1} parent=1 // pred_region
      %221 = dma.done [#allocation3], 32
    $region25: #{tpu_custom_call.1} parent=1 // pred_fallthru
      _
    %222 = vsyncpa [#allocation3], 1

</llo_original>
